<compile_context>
chip_gen: v7x
topology: tpu7x:2x2x1
jax: 0.10.0
libtpu: 0.0.40
codegen_flags: <defaults>
</compile_context>

<pallas_src>
import functools

import jax
import jax.numpy as jnp
from jax import lax
from jax.experimental import pallas as pl
from jax.experimental.pallas import tpu as pltpu

_MIB = 1024 * 1024


def _round_up(x, m):
    return ((x + m - 1) // m) * m


def _vmem_budget():
    """Returns (target_tile_bytes, vmem_limit_bytes) per TPU generation.

    v5e/v6e: 128 MiB VMEM per TensorCore -> big tiles, 96 MiB scoped limit.
    v7x:      64 MiB per TC              -> smaller tiles, 48 MiB limit (headroom).
    Falls back to the conservative (v7x) budget if the query is unavailable.
    """
    try:
        phys = int(pltpu.get_tpu_info().vmem_capacity_bytes)
    except Exception:
        phys = 64 * _MIB
    if phys >= 100 * _MIB:
        return 6 * _MIB, 96 * _MIB
    return 3 * _MIB, 48 * _MIB


def _choose_row_block(n_rows, n_classes, in_itemsize, target_tile_bytes, vmem_limit):
    """Row tile sized for ~target_tile_bytes of f32 intermediates, VMEM-safe."""
    rb = target_tile_bytes // max(1, n_classes * 4)
    # Keep the full footprint (2 inputs x 2 pipeline buffers in the input dtype
    # + ~5 live full-size f32 temporaries) comfortably under the VMEM limit.
    per_row = n_classes * (5 * 4 + 4 * in_itemsize)
    max_rb = (7 * vmem_limit // 10) // max(1, per_row)
    rb = min(rb, max_rb)
    rb = max(8, (rb // 8) * 8)
    rb = min(rb, _round_up(n_rows, 8))
    return rb


def _kl_kernel(t_ref, s_ref, w_ref, o_ref, *, inv_t, t_sq, n_rows, row_block):
    # (row_block, C) logit tiles; class axis last (maps to TPU lanes).
    t = t_ref[...].astype(jnp.float32)
    s = s_ref[...].astype(jnp.float32)
    if inv_t != 1.0:  # compile-time constant: free when T == 1
        t = t * inv_t
        s = s * inv_t

    # Numerically stable log-softmax pieces (two full-tile exps total).
    t_shift = t - jnp.max(t, axis=1, keepdims=True)
    s_shift = s - jnp.max(s, axis=1, keepdims=True)
    exp_t = jnp.exp(t_shift)
    exp_s = jnp.exp(s_shift)
    sum_t = jnp.sum(exp_t, axis=1, keepdims=True)   # (rb, 1)
    sum_s = jnp.sum(exp_s, axis=1, keepdims=True)   # (rb, 1)

    # sum_c p_t * (log p_t - log p_s)
    #   = (1/sum_t) * sum_c exp_t * (t_shift - s_shift) + log(sum_s) - log(sum_t)
    # The per-row log-ratio constant is pulled out of the lane reduction, so no
    # (rb, C) log_ratio tile is materialized and one full-tile VPU add is saved.
    dot_term = jnp.sum(exp_t * (t_shift - s_shift), axis=1, keepdims=True)  # (rb, 1)
    row_kl = dot_term / sum_t + (jnp.log(sum_s) - jnp.log(sum_t))           # (rb, 1)

    w = w_ref[...].astype(jnp.float32)                                      # (rb, 1)
    weighted = row_kl * w

    if n_rows % row_block != 0:
        # Ragged tail block: rows >= n_rows hold unspecified data.  Reductions
        # above are per-row, so garbage never touches valid rows; select the
        # dead rows to exactly 0 (NaN/Inf in them cannot leak through a select).
        row0 = pl.program_id(0) * row_block
        rid = lax.broadcasted_iota(jnp.int32, weighted.shape, 0) + row0
        weighted = jnp.where(rid < n_rows, weighted, 0.0)

    contrib = jnp.sum(weighted)                                             # scalar
    if t_sq != 1.0:  # compile-time constant: free when T == 1
        contrib = contrib * t_sq

    # Each grid step owns its own lane-dense (8, 128) output tile -> unmasked
    # store, no cross-step dependence ("parallel" grid axis).  Pre-scaling by
    # 1/1024 lets the wrapper do a dense jnp.sum(partials) with no strided slice.
    contrib = contrib * (1.0 / (8.0 * 128.0))
    o_ref[...] = jnp.broadcast_to(contrib, o_ref.shape).astype(jnp.float32)


def kl_divergence_sample(teacher_logit, student_logit, weights, temperature=1.0,
                         row_block=None):
    """Pallas implementation of KL_divergence_sample.forward. Returns a scalar.

    loss = dot( sum_c softmax(t/T)*(log_softmax(t/T) - log_softmax(s/T)), w ) * T^2

    Logits of any floating dtype are accepted and upcast to f32 inside the
    kernel; on HBM-bound chips (v5e/v6e) pass bf16 logits to halve HBM traffic.
    """
    N, C = teacher_logit.shape
    assert student_logit.shape == (N, C)
    assert weights.shape == (N,)

    in_itemsize = max(jnp.dtype(teacher_logit.dtype).itemsize,
                      jnp.dtype(student_logit.dtype).itemsize)
    target_tile_bytes, vmem_limit = _vmem_budget()
    if row_block is None:
        row_block = _choose_row_block(N, C, in_itemsize, target_tile_bytes,
                                      vmem_limit)
    assert row_block >= 8 and row_block % 8 == 0

    num_blocks = pl.cdiv(N, row_block)

    # No jnp.pad of the logits: the grid covers ceil(N / row_block) blocks of the
    # ORIGINAL arrays; the ragged tail (if any) is masked inside the kernel.
    w2 = weights.reshape(N, 1)

    kernel = functools.partial(
        _kl_kernel,
        inv_t=float(1.0 / temperature),
        t_sq=float(temperature) * float(temperature),
        n_rows=N,
        row_block=row_block,
    )

    # TODO(synk): for vocab-scale C (>= 32k) add a class-axis grid dimension with
    # an online (flash-style) LSE so the (row_block, C) f32 temporaries stay
    # within v7x's 64 MiB VMEM.
    # TODO(synk): on v7x, switch the row-block axis to pltpu.CORE_PARALLEL (or an
    # explicit core_map) so both TensorCores each stream half the blocks.
    partials = pl.pallas_call(
        kernel,
        out_shape=jax.ShapeDtypeStruct((8, num_blocks * 128), jnp.float32),
        grid_spec=pltpu.PrefetchScalarGridSpec(
            num_scalar_prefetch=0,
            grid=(num_blocks,),
            in_specs=[
                pl.BlockSpec((row_block, C), lambda i: (i, 0)),   # teacher logits
                pl.BlockSpec((row_block, C), lambda i: (i, 0)),   # student logits
                pl.BlockSpec((row_block, 1), lambda i: (i, 0)),   # per-sample weights
            ],
            out_specs=pl.BlockSpec((8, 128), lambda i: (0, i)),   # per-block partial
        ),
        compiler_params=pltpu.CompilerParams(
            dimension_semantics=("parallel",),
            vmem_limit_bytes=vmem_limit,
        ),
    )(teacher_logit, student_logit, w2)

    # Every element of a partial tile already holds contrib/1024; dense sum.
    return jnp.sum(partials)


def _reference(teacher_logit, student_logit, weights, temperature=1.0):
    T = temperature
    log_p_s = jax.nn.log_softmax(student_logit / T, axis=1)
    p_t = jax.nn.softmax(teacher_logit / T, axis=1)
    log_p_t = jax.nn.log_softmax(teacher_logit / T, axis=1)
    kl = p_t * (log_p_t - log_p_s) * T * T
    return jnp.dot(kl.sum(axis=1), weights)


if __name__ == "__main__":
    key = jax.random.PRNGKey(0)
    k1, k2, k3 = jax.random.split(key, 3)

    # Case 1: aligned batch, T != 1.
    N, C = 16, 32
    temperature = 2.0
    teacher = jax.random.normal(k1, (N, C), dtype=jnp.float32) * 3.0
    student = jax.random.normal(k2, (N, C), dtype=jnp.float32) * 3.0
    weights = jax.random.uniform(k3, (N,), dtype=jnp.float32)

    loss = kl_divergence_sample(teacher, student, weights, temperature)
    loss = jax.block_until_ready(loss)
    ref = _reference(teacher, student, weights, temperature)
    assert jnp.allclose(loss, ref, rtol=1e-5, atol=1e-5), (loss, ref)

    # Case 2: ragged batch (N not a multiple of row_block), T == 1 — exercises
    # the in-kernel tail masking path (no jnp.pad of the logits).
    N2 = 20
    t2 = jax.random.normal(k2, (N2, C), dtype=jnp.float32) * 3.0
    s2 = jax.random.normal(k3, (N2, C), dtype=jnp.float32) * 3.0
    w2 = jax.random.uniform(k1, (N2,), dtype=jnp.float32)

    loss2 = kl_divergence_sample(t2, s2, w2, 1.0, row_block=8)
    loss2 = jax.block_until_ready(loss2)
    ref2 = _reference(t2, s2, w2, 1.0)
    assert jnp.allclose(loss2, ref2, rtol=1e-5, atol=1e-5), (loss2, ref2)

    print("KERNEL_OK")
</pallas_src>

<mosaic_0001>
module attributes {stable_mosaic.version = 11 : i64} {
  func.func @_kl_kernel(%arg0: i32, %arg1: memref<16x32xf32, #tpu.memory_space<vmem>>, %arg2: memref<16x32xf32, #tpu.memory_space<vmem>>, %arg3: memref<16x1xf32, #tpu.memory_space<vmem>>, %arg4: memref<8x128xf32, #tpu.memory_space<vmem>>) attributes {dimension_semantics = [#tpu.dimension_semantics<parallel>], iteration_bounds = array<i64: 1>, scalar_prefetch = 0 : i64, scratch_operands = 0 : i64, tpu.core_type = #tpu.core_type<tc>, window_params = [{transform_indices = @transform_0, window_bounds = array<i64: 16, 32>}, {transform_indices = @transform_1, window_bounds = array<i64: 16, 32>}, {transform_indices = @transform_2, window_bounds = array<i64: 16, 1>}, {transform_indices = @transform_3, window_bounds = array<i64: 8, 128>}]} {
    %c0 = arith.constant 0 : index
    %c0_0 = arith.constant 0 : index
    %0 = vector.load %arg1[%c0, %c0_0] : memref<16x32xf32, #tpu.memory_space<vmem>>, vector<16x32xf32>
    %c0_1 = arith.constant 0 : index
    %c0_2 = arith.constant 0 : index
    %1 = vector.load %arg2[%c0_1, %c0_2] : memref<16x32xf32, #tpu.memory_space<vmem>>, vector<16x32xf32>
    %cst = arith.constant 5.000000e-01 : f32
    %2 = vector.broadcast %cst : f32 to vector<16x32xf32>
    %3 = arith.mulf %0, %2 : vector<16x32xf32>
    %cst_3 = arith.constant 5.000000e-01 : f32
    %4 = vector.broadcast %cst_3 : f32 to vector<16x32xf32>
    %5 = arith.mulf %1, %4 : vector<16x32xf32>
    %cst_4 = arith.constant dense<0xFF800000> : vector<16xf32>
    %6 = vector.multi_reduction <maximumf>, %3, %cst_4 [1] : vector<16x32xf32> to vector<16xf32>
    %7 = vector.shape_cast %6 : vector<16xf32> to vector<16x1xf32>
    %8 = vector.broadcast %7 : vector<16x1xf32> to vector<16x32xf32>
    %9 = arith.subf %3, %8 : vector<16x32xf32>
    %cst_5 = arith.constant dense<0xFF800000> : vector<16xf32>
    %10 = vector.multi_reduction <maximumf>, %5, %cst_5 [1] : vector<16x32xf32> to vector<16xf32>
    %11 = vector.shape_cast %10 : vector<16xf32> to vector<16x1xf32>
    %12 = vector.broadcast %11 : vector<16x1xf32> to vector<16x32xf32>
    %13 = arith.subf %5, %12 : vector<16x32xf32>
    %14 = math.exp %9 : vector<16x32xf32>
    %15 = math.exp %13 : vector<16x32xf32>
    %cst_6 = arith.constant dense<0.000000e+00> : vector<16xf32>
    %16 = vector.multi_reduction <add>, %14, %cst_6 [1] : vector<16x32xf32> to vector<16xf32>
    %17 = vector.shape_cast %16 : vector<16xf32> to vector<16x1xf32>
    %cst_7 = arith.constant dense<0.000000e+00> : vector<16xf32>
    %18 = vector.multi_reduction <add>, %15, %cst_7 [1] : vector<16x32xf32> to vector<16xf32>
    %19 = vector.shape_cast %18 : vector<16xf32> to vector<16x1xf32>
    %20 = arith.subf %9, %13 : vector<16x32xf32>
    %21 = arith.mulf %14, %20 : vector<16x32xf32>
    %cst_8 = arith.constant dense<0.000000e+00> : vector<16xf32>
    %22 = vector.multi_reduction <add>, %21, %cst_8 [1] : vector<16x32xf32> to vector<16xf32>
    %23 = vector.shape_cast %22 : vector<16xf32> to vector<16x1xf32>
    %24 = arith.divf %23, %17 : vector<16x1xf32>
    %25 = math.log %19 : vector<16x1xf32>
    %26 = math.log %17 : vector<16x1xf32>
    %27 = arith.subf %25, %26 : vector<16x1xf32>
    %28 = arith.addf %24, %27 : vector<16x1xf32>
    %c0_9 = arith.constant 0 : index
    %c0_10 = arith.constant 0 : index
    %29 = vector.load %arg3[%c0_9, %c0_10] : memref<16x1xf32, #tpu.memory_space<vmem>>, vector<16x1xf32>
    %30 = arith.mulf %28, %29 : vector<16x1xf32>
    %31 = vector.shape_cast %30 : vector<16x1xf32> to vector<1x16x1xf32>
    %cst_11 = arith.constant dense<0.000000e+00> : vector<1xf32>
    %32 = vector.multi_reduction <add>, %31, %cst_11 [1, 2] : vector<1x16x1xf32> to vector<1xf32>
    %33 = vector.shape_cast %32 : vector<1xf32> to vector<1x1x1xf32>
    %34 = vector.extract %33[0, 0, 0] : f32 from vector<1x1x1xf32>
    %cst_12 = arith.constant 4.000000e+00 : f32
    %35 = arith.mulf %34, %cst_12 : f32
    %cst_13 = arith.constant 9.765625E-4 : f32
    %36 = arith.mulf %35, %cst_13 : f32
    %37 = vector.broadcast %36 : f32 to vector<8x128xf32>
    %c0_14 = arith.constant 0 : index
    %c0_15 = arith.constant 0 : index
    %38 = vector.load %arg4[%c0_14, %c0_15] : memref<8x128xf32, #tpu.memory_space<vmem>>, vector<8x128xf32>
    tpu.vector_store %arg4[%c0_14, %c0_15], %37 {strides = array<i32>} : memref<8x128xf32, #tpu.memory_space<vmem>>, vector<8x128xf32>,
    return
  }
  func.func @transform_0(%arg0: i32) -> (i32, i32) {
    %c0_i32 = arith.constant 0 : i32
    %c0_i32_0 = arith.constant 0 : i32
    return %arg0, %c0_i32 : i32, i32
  }
  func.func @transform_1(%arg0: i32) -> (i32, i32) {
    %c0_i32 = arith.constant 0 : i32
    %c0_i32_0 = arith.constant 0 : i32
    return %arg0, %c0_i32 : i32, i32
  }
  func.func @transform_2(%arg0: i32) -> (i32, i32) {
    %c0_i32 = arith.constant 0 : i32
    %c0_i32_0 = arith.constant 0 : i32
    return %arg0, %c0_i32 : i32, i32
  }
  func.func @transform_3(%arg0: i32) -> (i32, i32) {
    %c0_i32 = arith.constant 0 : i32
    %c0_i32_0 = arith.constant 0 : i32
    return %c0_i32, %arg0 : i32, i32
  }
}

</mosaic_0001>

<llo_original>
// kernel: tpu_custom_call.1
$region0: #{tpu_custom_call.1}
  #allocation0 [shape = 'u32[]', space=smem, size = 0x4, offset = 0x4, fixed_abs, tag = 'smem constant byte address 0x4 - core index']
  #allocation1 [shape = 'u32[144,128]{1,0:T(1,128)}', space=vmem, size = 0x12000, scoped, tag = 'internal scratch']
  %s0 = inlined_call_operand.vmem [shape: f32[16,32], index: 0, kind: input, shape index: {}]
  %s1 = inlined_call_operand.hbm [shape: f32[16,32], index: 1, kind: input, shape index: {}]
  %s2 = inlined_call_operand.vmem [shape: f32[16,1], index: 2, kind: input, shape index: {}]
  %s3 = inlined_call_operand.hbm [shape: f32[8,128], index: 3, kind: output, shape index: {}]
  %s4 = sld [smem:[#allocation0]]
  $region26: #{tpu_custom_call.1} parent=0
    _
  %s6 = ssub.s32 1, %s4
  %s7 = scalar_select 0, %s6, %s4
  $region1: #{tpu_custom_call.1} parent=0
    #allocation2 [shape = 'u8[8192]{0}', space=vmem, size = 0x2000, scoped, tag = 'input window, operand 1, single buffered']
    #allocation3 [shape = 's32[1]{0}', space=sflag, size = 0x4, scoped, tag = 'scoped memory for tpu_custom_call.1']
    #allocation4 [shape = 's32[1]{0}', space=sflag, size = 0x4, scoped, tag = 'scoped memory for tpu_custom_call.1']
    #allocation5 [shape = 'u8[4096]{0}', space=vmem, size = 0x1000, scoped, tag = 'output window, operand 0, single buffered']
    %8 = vsyncpa [#allocation3], 0
    %9 = vsyncpa [#allocation4], 0
    // Predicated region
    $region2: #{tpu_custom_call.1} parent=1 // pred_check
      _
    $region3: #{tpu_custom_call.1} parent=1 // pred_check_branch
      %11 = sbr.rel (0) target = $region5
    $region4: #{tpu_custom_call.1} parent=1 // pred_region
      _
    $region5: #{tpu_custom_call.1} parent=1 // pred_fallthru
      _
    // Predicated region
    $region6: #{tpu_custom_call.1} parent=1 // pred_check
      _
    $region7: #{tpu_custom_call.1} parent=1 // pred_check_branch
      %13 = sbr.rel (0) target = $region9
    $region8: #{tpu_custom_call.1} parent=1 // pred_region
      %s15 = ssub.s32 256, 256
      %16 = vsyncadd [#allocation3], %s15
      %s17 = sshll.u32 [#allocation2], 4
      %s18 = int_to_ptr.vmem [resolvable:$true] %s17
      %23 = dma.hbm_to_vmem [thread:$0]  %s1, 256, %s18, [#allocation3], 128, 128, 8
    $region9: #{tpu_custom_call.1} parent=1 // pred_fallthru
      _
    // Predicated region
    $region10: #{tpu_custom_call.1} parent=1 // pred_check
      _
    $region11: #{tpu_custom_call.1} parent=1 // pred_check_branch
      %25 = sbr.rel (0) target = $region13
    $region12: #{tpu_custom_call.1} parent=1 // pred_region
      _
    $region13: #{tpu_custom_call.1} parent=1 // pred_fallthru
      _
    // Predicated region
    $region14: #{tpu_custom_call.1} parent=1 // pred_check
      _
    $region15: #{tpu_custom_call.1} parent=1 // pred_check_branch
      %27 = sbr.rel (0) target = $region17
    $region16: #{tpu_custom_call.1} parent=1 // pred_region
      %28 = dma.done [#allocation3], 256
    $region17: #{tpu_custom_call.1} parent=1 // pred_fallthru
      _
    %v29 = vld [vmem:[%s0] sm:$0xff]
    %v30 = vld [vmem:[%s0 + $0x8] sm:$0xff]
    %v31 = vld [vmem:[#allocation2] sm:$0xff]
    %v32 = vld [vmem:[#allocation2 + $0x8] sm:$0xff]
    %v33 = vmul.f32 %v29, 0.5
    %v34 = vmul.f32 %v30, 0.5
    %v35 = vmul.f32 %v31, 0.5
    %v36 = vmul.f32 %v32, 0.5
    %vm37 = vcmask 261120
    %v38 = vsel %vm37, %v33, -inf
    %39 = vmax.xlane.f32.xlu0 %v38
    %v40 = vpop.xlane.xlu0 %39
    %v41 = vsel %vm37, %v34, -inf
    %42 = vmax.xlane.f32.xlu0 %v41
    %v43 = vpop.xlane.xlu0 %42
    %v44 = vsub.f32 %v33, %v40
    %v45 = vsub.f32 %v34, %v43
    %v46 = vsel %vm37, %v35, -inf
    %47 = vmax.xlane.f32.xlu0 %v46
    %v48 = vpop.xlane.xlu0 %47
    %v49 = vsel %vm37, %v36, -inf
    %50 = vmax.xlane.f32.xlu0 %v49
    %v51 = vpop.xlane.xlu0 %50
    %v52 = vsub.f32 %v35, %v48
    %v53 = vsub.f32 %v36, %v51
    %v54 = vmul.f32 %v44, 1.442695
    %v55 = vpow.pop %v54
    %v56 = vmul.f32 %v45, 1.442695
    %v57 = vpow.pop %v56
    %v58 = vmul.f32 %v52, 1.442695
    %v59 = vpow.pop %v58
    %v60 = vmul.f32 %v53, 1.442695
    %v61 = vpow.pop %v60
    %v62 = vsel %vm37, %v55, 0.0
    %63 = vadd.xlane.f32.xlu0 %v62
    %v64 = vpop.xlane.xlu0 %63
    %v65 = vsel %vm37, %v57, 0.0
    %66 = vadd.xlane.f32.xlu0 %v65
    %v67 = vpop.xlane.xlu0 %66
    %v68 = vsel %vm37, %v59, 0.0
    %69 = vadd.xlane.f32.xlu0 %v68
    %v70 = vpop.xlane.xlu0 %69
    %v71 = vsel %vm37, %v61, 0.0
    %72 = vadd.xlane.f32.xlu0 %v71
    %v73 = vpop.xlane.xlu0 %72
    %v74 = vsub.f32 %v44, %v52
    %v75 = vsub.f32 %v45, %v53
    %v76 = vmul.f32 %v55, %v74
    %v77 = vmul.f32 %v57, %v75
    %v78 = vsel %vm37, %v76, 0.0
    %79 = vadd.xlane.f32.xlu0 %v78
    %v80 = vpop.xlane.xlu0 %79
    %v81 = vsel %vm37, %v77, 0.0
    %82 = vadd.xlane.f32.xlu0 %v81
    %v83 = vpop.xlane.xlu0 %82
    %v84 = vrcp.pop %v64
    %v85 = vmul.f32 %v80, %v84
    %v86 = vrcp.pop %v67
    %v87 = vmul.f32 %v83, %v86
    %v88 = vlog2.pop %v70
    %v89 = vmul.f32 %v88, 0.6931472
    %v90 = vlog2.pop %v73
    %v91 = vmul.f32 %v90, 0.6931472
    %v92 = vlog2.pop %v64
    %v93 = vmul.f32 %v92, 0.6931472
    %v94 = vlog2.pop %v67
    %v95 = vmul.f32 %v94, 0.6931472
    %v96 = vsub.f32 %v89, %v93
    %v97 = vsub.f32 %v91, %v95
    %v98 = vadd.f32 %v85, %v96
    %v99 = vadd.f32 %v87, %v97
    %v100 = vld [vmem:[%s2] sm:$0xff]
    %v101 = vld [vmem:[%s2 + $0x8] sm:$0xff]
    %v102 = vmul.f32 %v98, %v100
    %v103 = vmul.f32 %v99, %v101
    %vm104 = vcmask 7168
    %v105 = vsel %vm104, %v102, 0.0
    %v106 = vsel %vm104, %v103, 0.0
    %v107 = vadd.f32 %v105, %v106
    %108 = vadd.xlane.f32.xlu0 %v107
    %v109 = vpop.xlane.xlu0 %108
    %v110 = vrot.slane %v109, 4
    %v111 = vadd.f32 %v109, %v110
    %v112 = vrot.slane %v111, 2
    %v113 = vadd.f32 %v111, %v112
    %v114 = vrot.slane %v113, 1
    %v115 = vadd.f32 %v113, %v114
    %s116 = vtos %v115
    %s117 = smul.f32 %s116, 4.0
    %s118 = smul.f32 %s117, 0.0009765625
    %v119 = vstv %s118
    %120 = vst [vmem:[#allocation5] sm:$0xff] %v119
    // Predicated region
    $region18: #{tpu_custom_call.1} parent=1 // pred_check
      _
    $region19: #{tpu_custom_call.1} parent=1 // pred_check_branch
      %122 = sbr.rel (0) target = $region21
    $region20: #{tpu_custom_call.1} parent=1 // pred_region
      %s124 = ssub.s32 128, 128
      %125 = vsyncadd [#allocation4], %s124
      %s127 = sshll.u32 [#allocation5], 4
      %s128 = int_to_ptr.vmem [resolvable:$true] %s127
      %130 = dma.vmem_to_hbm [thread:$0]  %s128, 128, %s3, [#allocation4]
    $region21: #{tpu_custom_call.1} parent=1 // pred_fallthru
      _
    // Predicated region
    $region22: #{tpu_custom_call.1} parent=1 // pred_check
      _
    $region23: #{tpu_custom_call.1} parent=1 // pred_check_branch
      %132 = sbr.rel (0) target = $region25
    $region24: #{tpu_custom_call.1} parent=1 // pred_region
      %133 = dma.done [#allocation4], 128
    $region25: #{tpu_custom_call.1} parent=1 // pred_fallthru
      _
    %134 = vsyncpa [#allocation3], 1
    %135 = vsyncpa [#allocation4], 1

</llo_original>
